<compile_context>
chip_gen: v6e
topology: v6e:2x2x1
jax: 0.10.0
libtpu: 0.0.40
codegen_flags: <defaults>
</compile_context>

<pallas_src>
import functools

import jax
import jax.numpy as jnp
from jax.experimental import pallas as pl
from jax.experimental.pallas import tpu as pltpu

NEMB = 158
HIDDEN = 4 * NEMB  # 632
DROPOUT_P = 0.2    # identity in eval-mode forward
LANE = 128
SUBLANE = 8


def _round_up(x, m):
    return ((x + m - 1) // m) * m


def ffn_kernel(x_ref, w1_ref, b1_ref, w2_ref, b2_ref, o_ref):
    # x_ref:  (tm, 158)   f32   (cast to bf16 here, on the VPU)
    # w1_ref: (158, 640)  bf16  (resident in VMEM: constant index map)
    # b1_ref: (1, 640)    f32
    # w2_ref: (640, 158)  bf16  (resident in VMEM)
    # b2_ref: (1, 158)    f32
    # o_ref:  (tm, 158)   f32 (or bf16)
    x = x_ref[...].astype(jnp.bfloat16)
    # bf16 x bf16 -> f32 accumulation on the MXU.
    h = jnp.dot(x, w1_ref[...], preferred_element_type=jnp.float32)
    h = jnp.maximum(h + b1_ref[...], 0.0)          # bias + ReLU in f32 (VPU)
    h = h.astype(jnp.bfloat16)                     # back to bf16 for 2nd MXU pass
    y = jnp.dot(h, w2_ref[...], preferred_element_type=jnp.float32) + b2_ref[...]
    # Dropout (p=0.2) is identity in eval mode.
    o_ref[...] = y.astype(o_ref.dtype)


def prepare_params(w1, b1, w2, b2):
    """One-time parameter prep (do this at init/load time, NOT per call).

    Pads only the hidden dim to a lane multiple (632 -> 640) and casts the
    weights to bf16. Zero padding of the hidden dim is mathematically a no-op:
    the padded hidden columns are relu(0) = 0 and multiply zero rows of w2.
    """
    nemb, hidden = w1.shape
    hid_pad = _round_up(hidden, LANE)
    w1_p = jnp.pad(w1, ((0, 0), (0, hid_pad - hidden))).astype(jnp.bfloat16)
    b1_p = jnp.pad(b1, ((0, 0), (0, hid_pad - hidden))).astype(jnp.float32)
    w2_p = jnp.pad(w2, ((0, hid_pad - hidden), (0, 0))).astype(jnp.bfloat16)
    b2_p = b2.astype(jnp.float32)
    return w1_p, b1_p, w2_p, b2_p


def _pick_row_tiling(M, tm_cap):
    """Pick (M_pad, tm): pad rows to at most one 128-granule, tm divides M_pad."""
    if M < LANE:
        # Tiny inputs: single tile, pad only to the sublane granule (<= 7 rows).
        m_pad = _round_up(M, SUBLANE)
        return m_pad, m_pad
    m_pad = _round_up(M, LANE)
    cap = min(tm_cap, m_pad)
    # Keep grid >= 2 whenever there is enough work so v7x's two TensorCores
    # both get row tiles (dimension_semantics=("parallel",)).
    if m_pad >= 2 * LANE:
        cap = min(cap, (m_pad // 2) // LANE * LANE)
    n = m_pad // LANE
    best = 1
    for d in range(1, n + 1):
        if n % d == 0 and LANE * d <= cap:
            best = d
    return m_pad, LANE * best


@functools.partial(jax.jit, static_argnames=("tm", "out_dtype"))
def ffn_forward(x, w1_p, b1_p, w2_p, b2_p, *, tm=512, out_dtype=jnp.float32):
    """x: (batch, seq, 158) f32; params from prepare_params(). Returns (batch, seq, 158)."""
    batch, seq, nemb = x.shape
    hid_pad = w1_p.shape[1]
    M = batch * seq

    M_pad, tm = _pick_row_tiling(M, tm)

    x2d = x.reshape(M, nemb)
    if M_pad != M:
        x2d = jnp.pad(x2d, ((0, M_pad - M), (0, 0)))   # <128 garbage rows, sliced off below

    cost = pl.CostEstimate(
        flops=4 * M_pad * nemb * hid_pad,               # two matmuls
        transcendentals=0,
        bytes_accessed=(M_pad * nemb * 4                # x (f32 in)
                        + M_pad * nemb * jnp.dtype(out_dtype).itemsize  # out
                        + 2 * nemb * hid_pad * 2        # weights (bf16, resident)
                        + (hid_pad + nemb) * 4),        # biases (f32)
    )

    out2d = pl.pallas_call(
        ffn_kernel,
        out_shape=jax.ShapeDtypeStruct((M_pad, nemb), out_dtype),
        grid_spec=pltpu.PrefetchScalarGridSpec(
            num_scalar_prefetch=0,
            grid=(M_pad // tm,),
            in_specs=[
                pl.BlockSpec((tm, nemb), lambda i: (i, 0)),        # x: streamed row tiles
                pl.BlockSpec((nemb, hid_pad), lambda i: (0, 0)),   # w1: resident
                pl.BlockSpec((1, hid_pad), lambda i: (0, 0)),      # b1: resident
                pl.BlockSpec((hid_pad, nemb), lambda i: (0, 0)),   # w2: resident
                pl.BlockSpec((1, nemb), lambda i: (0, 0)),         # b2: resident
            ],
            out_specs=pl.BlockSpec((tm, nemb), lambda i: (i, 0)),
        ),
        compiler_params=pltpu.CompilerParams(
            dimension_semantics=("parallel",),
        ),
        cost_estimate=cost,
    )(x2d, w1_p, b1_p, w2_p, b2_p)

    if M_pad != M:
        out2d = out2d[:M]
    return out2d.reshape(batch, seq, nemb)


def init_params(key, nemb=NEMB, hidden=HIDDEN):
    """Deterministic init matching the PyTorch Linear shapes.

    PyTorch stores Linear weights as (out, in); we generate them as (in, out)
    directly (i.e. pre-transposed) so the kernel does x @ W.
    """
    k1, k2, k3, k4 = jax.random.split(key, 4)
    s1 = 1.0 / jnp.sqrt(nemb)
    s2 = 1.0 / jnp.sqrt(hidden)
    w1 = jax.random.uniform(k1, (nemb, hidden), jnp.float32, -s1, s1)
    b1 = jax.random.uniform(k2, (1, hidden), jnp.float32, -s1, s1)
    w2 = jax.random.uniform(k3, (hidden, nemb), jnp.float32, -s2, s2)
    b2 = jax.random.uniform(k4, (1, nemb), jnp.float32, -s2, s2)
    return w1, b1, w2, b2


if __name__ == "__main__":
    key = jax.random.PRNGKey(0)
    kx, kp = jax.random.split(key)

    batch, seq = 2, 8
    x = jax.random.normal(kx, (batch, seq, NEMB), jnp.float32)
    w1, b1, w2, b2 = init_params(kp)

    # One-time weight prep (padding + bf16 cast) outside the jitted forward.
    w1_p, b1_p, w2_p, b2_p = prepare_params(w1, b1, w2, b2)

    out = ffn_forward(x, w1_p, b1_p, w2_p, b2_p)
    out = jax.block_until_ready(out)

    # Reference check in plain JAX f32 (eval-mode dropout = identity).
    ref = jnp.maximum(x.reshape(-1, NEMB) @ w1 + b1, 0.0) @ w2 + b2
    ref = ref.reshape(batch, seq, NEMB)
    assert out.shape == (batch, seq, NEMB)
    # Looser tolerance: kernel runs the matmuls with bf16 operands (f32 accumulate).
    assert jnp.allclose(out, ref, atol=5e-2, rtol=5e-2), float(jnp.max(jnp.abs(out - ref)))

    print("KERNEL_OK")
</pallas_src>

<mosaic_0001>
module attributes {stable_mosaic.version = 11 : i64} {
  func.func @ffn_kernel(%arg0: i32, %arg1: memref<16x158xf32, #tpu.memory_space<vmem>>, %arg2: memref<158x640xbf16, #tpu.memory_space<vmem>>, %arg3: memref<1x640xf32, #tpu.memory_space<vmem>>, %arg4: memref<640x158xbf16, #tpu.memory_space<vmem>>, %arg5: memref<1x158xf32, #tpu.memory_space<vmem>>, %arg6: memref<16x158xf32, #tpu.memory_space<vmem>>) attributes {dimension_semantics = [#tpu.dimension_semantics<parallel>], iteration_bounds = array<i64: 1>, scalar_prefetch = 0 : i64, scratch_operands = 0 : i64, tpu.core_type = #tpu.core_type<tc>, window_params = [{transform_indices = @transform_0, window_bounds = array<i64: 16, 158>}, {pipeline_mode = #tpu.pipeline_mode<synchronous>, transform_indices = @transform_1, window_bounds = array<i64: 158, 640>}, {pipeline_mode = #tpu.pipeline_mode<synchronous>, transform_indices = @transform_2, window_bounds = array<i64: 1, 640>}, {pipeline_mode = #tpu.pipeline_mode<synchronous>, transform_indices = @transform_3, window_bounds = array<i64: 640, 158>}, {pipeline_mode = #tpu.pipeline_mode<synchronous>, transform_indices = @transform_4, window_bounds = array<i64: 1, 158>}, {transform_indices = @transform_5, window_bounds = array<i64: 16, 158>}]} {
    %c0 = arith.constant 0 : index
    %c0_0 = arith.constant 0 : index
    %0 = vector.load %arg1[%c0, %c0_0] : memref<16x158xf32, #tpu.memory_space<vmem>>, vector<16x158xf32>
    %1 = arith.truncf %0 : vector<16x158xf32> to vector<16x158xbf16>
    %c0_1 = arith.constant 0 : index
    %c0_2 = arith.constant 0 : index
    %2 = vector.load %arg2[%c0_1, %c0_2] : memref<158x640xbf16, #tpu.memory_space<vmem>>, vector<158x640xbf16>
    %cst = arith.constant dense<0.000000e+00> : vector<16x640xf32>
    %3 = tpu.matmul %1, %2, %cst {dimension_numbers = #tpu.dot_dimension_numbers<[1], [0], [0], [1], [0, 0, 1, 1], [], []>} : vector<16x158xbf16>, vector<158x640xbf16>, vector<16x640xf32> -> vector<16x640xf32>
    %c0_3 = arith.constant 0 : index
    %c0_4 = arith.constant 0 : index
    %4 = vector.load %arg3[%c0_3, %c0_4] : memref<1x640xf32, #tpu.memory_space<vmem>>, vector<1x640xf32>
    %5 = vector.broadcast %4 : vector<1x640xf32> to vector<16x640xf32>
    %6 = arith.addf %3, %5 : vector<16x640xf32>
    %cst_5 = arith.constant 0.000000e+00 : f32
    %7 = vector.broadcast %cst_5 : f32 to vector<16x640xf32>
    %8 = arith.maximumf %6, %7 : vector<16x640xf32>
    %9 = arith.truncf %8 : vector<16x640xf32> to vector<16x640xbf16>
    %c0_6 = arith.constant 0 : index
    %c0_7 = arith.constant 0 : index
    %10 = vector.load %arg4[%c0_6, %c0_7] : memref<640x158xbf16, #tpu.memory_space<vmem>>, vector<640x158xbf16>
    %cst_8 = arith.constant dense<0.000000e+00> : vector<16x158xf32>
    %11 = tpu.matmul %9, %10, %cst_8 {dimension_numbers = #tpu.dot_dimension_numbers<[1], [0], [0], [1], [0, 0, 1, 1], [], []>} : vector<16x640xbf16>, vector<640x158xbf16>, vector<16x158xf32> -> vector<16x158xf32>
    %c0_9 = arith.constant 0 : index
    %c0_10 = arith.constant 0 : index
    %12 = vector.load %arg5[%c0_9, %c0_10] : memref<1x158xf32, #tpu.memory_space<vmem>>, vector<1x158xf32>
    %13 = vector.broadcast %12 : vector<1x158xf32> to vector<16x158xf32>
    %14 = arith.addf %11, %13 : vector<16x158xf32>
    %c0_11 = arith.constant 0 : index
    %c0_12 = arith.constant 0 : index
    %15 = vector.load %arg6[%c0_11, %c0_12] : memref<16x158xf32, #tpu.memory_space<vmem>>, vector<16x158xf32>
    tpu.vector_store %arg6[%c0_11, %c0_12], %14 {strides = array<i32>} : memref<16x158xf32, #tpu.memory_space<vmem>>, vector<16x158xf32>,
    return
  }
  func.func @transform_0(%arg0: i32) -> (i32, i32) {
    %c0_i32 = arith.constant 0 : i32
    %c0_i32_0 = arith.constant 0 : i32
    return %arg0, %c0_i32 : i32, i32
  }
  func.func @transform_1(%arg0: i32) -> (i32, i32) {
    %c0_i32 = arith.constant 0 : i32
    %c0_i32_0 = arith.constant 0 : i32
    %c0_i32_1 = arith.constant 0 : i32
    return %c0_i32, %c0_i32_0 : i32, i32
  }
  func.func @transform_2(%arg0: i32) -> (i32, i32) {
    %c0_i32 = arith.constant 0 : i32
    %c0_i32_0 = arith.constant 0 : i32
    %c0_i32_1 = arith.constant 0 : i32
    return %c0_i32, %c0_i32_0 : i32, i32
  }
  func.func @transform_3(%arg0: i32) -> (i32, i32) {
    %c0_i32 = arith.constant 0 : i32
    %c0_i32_0 = arith.constant 0 : i32
    %c0_i32_1 = arith.constant 0 : i32
    return %c0_i32, %c0_i32_0 : i32, i32
  }
  func.func @transform_4(%arg0: i32) -> (i32, i32) {
    %c0_i32 = arith.constant 0 : i32
    %c0_i32_0 = arith.constant 0 : i32
    %c0_i32_1 = arith.constant 0 : i32
    return %c0_i32, %c0_i32_0 : i32, i32
  }
  func.func @transform_5(%arg0: i32) -> (i32, i32) {
    %c0_i32 = arith.constant 0 : i32
    %c0_i32_0 = arith.constant 0 : i32
    return %arg0, %c0_i32 : i32, i32
  }
}

</mosaic_0001>

<llo_original>
// kernel: ffn_forward.1
$region0: #{ffn_forward.1}
  #allocation0 [shape = 'u32[]', space=smem, size = 0x4, offset = 0x4, fixed_abs, tag = 'smem constant byte address 0x4 - core index']
  #allocation1 [shape = 'u32[144,128]{1,0:T(1,128)}', space=vmem, size = 0x12000, scoped, tag = 'internal scratch']
  %s0 = inlined_call_operand.vmem [shape: f32[16,158], index: 0, kind: input, shape index: {}]
  %s1 = inlined_call_operand.vmem [shape: bf16[158,640], index: 1, kind: input, shape index: {}]
  %s2 = inlined_call_operand.vmem [shape: f32[1,640], index: 2, kind: input, shape index: {}]
  %s3 = inlined_call_operand.vmem [shape: bf16[640,158], index: 3, kind: input, shape index: {}]
  %s4 = inlined_call_operand.vmem [shape: f32[1,158], index: 4, kind: input, shape index: {}]
  %s5 = inlined_call_operand.hbm [shape: f32[16,158], index: 5, kind: output, shape index: {}]
  %s6 = sld [smem:[#allocation0]]
  $region30: #{ffn_forward.1} parent=0
    _
  %s8 = ssub.s32 1, %s6
  %s9 = scalar_select 0, %s8, %s6
  $region1: #{ffn_forward.1} parent=0
    #allocation2 [shape = 'u8[16384]{0}', space=vmem, size = 0x4000, scoped, tag = 'output window, operand 0, single buffered']
    #allocation3 [shape = 's32[1]{0}', space=sflag, size = 0x4, scoped, tag = 'scoped memory for ffn_forward.1']
    %10 = vsyncpa [#allocation3], 0
    // Predicated region
    $region2: #{ffn_forward.1} parent=1 // pred_check
      _
    $region3: #{ffn_forward.1} parent=1 // pred_check_branch
      %12 = sbr.rel (0) target = $region5
    $region4: #{ffn_forward.1} parent=1 // pred_region
      _
    $region5: #{ffn_forward.1} parent=1 // pred_fallthru
      _
    // Predicated region
    $region6: #{ffn_forward.1} parent=1 // pred_check
      _
    $region7: #{ffn_forward.1} parent=1 // pred_check_branch
      %14 = sbr.rel (0) target = $region9
    $region8: #{ffn_forward.1} parent=1 // pred_region
      _
    $region9: #{ffn_forward.1} parent=1 // pred_fallthru
      _
    // Predicated region
    $region10: #{ffn_forward.1} parent=1 // pred_check
      _
    $region11: #{ffn_forward.1} parent=1 // pred_check_branch
      %16 = sbr.rel (0) target = $region13
    $region12: #{ffn_forward.1} parent=1 // pred_region
      _
    $region13: #{ffn_forward.1} parent=1 // pred_fallthru
      _
    // Predicated region
    $region14: #{ffn_forward.1} parent=1 // pred_check
      _
    $region15: #{ffn_forward.1} parent=1 // pred_check_branch
      %18 = sbr.rel (0) target = $region17
    $region16: #{ffn_forward.1} parent=1 // pred_region
      _
    $region17: #{ffn_forward.1} parent=1 // pred_fallthru
      _
    // Predicated region
    $region18: #{ffn_forward.1} parent=1 // pred_check
      _
    $region19: #{ffn_forward.1} parent=1 // pred_check_branch
      %20 = sbr.rel (0) target = $region21
    $region20: #{ffn_forward.1} parent=1 // pred_region
      _
    $region21: #{ffn_forward.1} parent=1 // pred_fallthru
      _
    %v22 = vld [vmem:[%s0] sm:$0xff]
    %v23 = vld [vmem:[%s0 + $0x8] sm:$0xff]
    %v24 = vld [vmem:[%s0 + $0x10] sm:$0xff]
    %v25 = vld [vmem:[%s0 + $0x18] sm:$0xff]
    %v26 = vpack.c.bf16 %v24, %v22
    %v27 = vpack.c.bf16 %v25, %v23
    %v28 = vld [vmem:[%s1] sm:$0xff]
    %v29 = vld [vmem:[%s1 + $0x8] sm:$0xff]
    %v30 = vld [vmem:[%s1 + $0x10] sm:$0xf]
    %v31 = vld [vmem:[%s1 + $0x14] sm:$0xff]
    %v32 = vld [vmem:[%s1 + $0x1c] sm:$0xff]
    %v33 = vld [vmem:[%s1 + $0x24] sm:$0xf]
    %v34 = vld [vmem:[%s1 + $0x28] sm:$0xff]
    %v35 = vld [vmem:[%s1 + $0x30] sm:$0xff]
    %v36 = vld [vmem:[%s1 + $0x38] sm:$0xf]
    %v37 = vld [vmem:[%s1 + $0x3c] sm:$0xff]
    %v38 = vld [vmem:[%s1 + $0x44] sm:$0xff]
    %v39 = vld [vmem:[%s1 + $0x4c] sm:$0xf]
    %v40 = vld [vmem:[%s1 + $0x50] sm:$0xff]
    %v41 = vld [vmem:[%s1 + $0x58] sm:$0xff]
    %v42 = vld [vmem:[%s1 + $0x60] sm:$0xf]
    %v43 = vld [vmem:[%s1 + $0x64] sm:$0xff]
    %v44 = vld [vmem:[%s1 + $0x6c] sm:$0xff]
    %v45 = vld [vmem:[%s1 + $0x74] sm:$0xf]
    %v46 = vld [vmem:[%s1 + $0x78] sm:$0xff]
    %v47 = vld [vmem:[%s1 + $0x80] sm:$0xff]
    %v48 = vld [vmem:[%s1 + $0x88] sm:$0xf]
    %v49 = vld [vmem:[%s1 + $0x8c] sm:$0xff]
    %v50 = vld [vmem:[%s1 + $0x94] sm:$0xff]
    %v51 = vld [vmem:[%s1 + $0x9c] sm:$0xf]
    %v52 = vld [vmem:[%s1 + $0xa0] sm:$0xff]
    %v53 = vld [vmem:[%s1 + $0xa8] sm:$0xff]
    %v54 = vld [vmem:[%s1 + $0xb0] sm:$0xf]
    %v55 = vld [vmem:[%s1 + $0xb4] sm:$0xff]
    %v56 = vld [vmem:[%s1 + $0xbc] sm:$0xff]
    %v57 = vld [vmem:[%s1 + $0xc4] sm:$0xf]
    %v58 = vld [vmem:[%s1 + $0xc8] sm:$0xff]
    %v59 = vld [vmem:[%s1 + $0xd0] sm:$0xff]
    %v60 = vld [vmem:[%s1 + $0xd8] sm:$0xf]
    %v61 = vld [vmem:[%s1 + $0xdc] sm:$0xff]
    %v62 = vld [vmem:[%s1 + $0xe4] sm:$0xff]
    %v63 = vld [vmem:[%s1 + $0xec] sm:$0xf]
    %v64 = vld [vmem:[%s1 + $0xf0] sm:$0xff]
    %v65 = vld [vmem:[%s1 + $0xf8] sm:$0xff]
    %v66 = vld [vmem:[%s1 + $0x100] sm:$0xf]
    %v67 = vld [vmem:[%s1 + $0x104] sm:$0xff]
    %v68 = vld [vmem:[%s1 + $0x10c] sm:$0xff]
    %v69 = vld [vmem:[%s1 + $0x114] sm:$0xf]
    %v70 = vld [vmem:[%s1 + $0x118] sm:$0xff]
    %v71 = vld [vmem:[%s1 + $0x120] sm:$0xff]
    %v72 = vld [vmem:[%s1 + $0x128] sm:$0xf]
    %v73 = vld [vmem:[%s1 + $0x12c] sm:$0xff]
    %v74 = vld [vmem:[%s1 + $0x134] sm:$0xff]
    %v75 = vld [vmem:[%s1 + $0x13c] sm:$0xf]
    %v76 = vld [vmem:[%s1 + $0x140] sm:$0xff]
    %v77 = vld [vmem:[%s1 + $0x148] sm:$0xff]
    %v78 = vld [vmem:[%s1 + $0x150] sm:$0xf]
    %v79 = vld [vmem:[%s1 + $0x154] sm:$0xff]
    %v80 = vld [vmem:[%s1 + $0x15c] sm:$0xff]
    %v81 = vld [vmem:[%s1 + $0x164] sm:$0xf]
    %v82 = vld [vmem:[%s1 + $0x168] sm:$0xff]
    %v83 = vld [vmem:[%s1 + $0x170] sm:$0xff]
    %v84 = vld [vmem:[%s1 + $0x178] sm:$0xf]
    %v85 = vld [vmem:[%s1 + $0x17c] sm:$0x77]
    %v86 = vld [vmem:[%s1 + $0x184] sm:$0x77]
    %v87 = vld [vmem:[%s1 + $0x18c] sm:$0x7]
    %v88 = vld [vmem:[%s2] sm:$0x1f]
    %v90 = vlaneseq
    %v91 = vshrl.u32 %v90, 7
    %v92 = vsub.s32 0, %v91
    %v93 = vrot.slane %v88, %v92
    %v94 = vlaneseq
    %v95 = vshrl.u32 %v94, 7
    %v96 = vsub.s32 1, %v95
    %v97 = vrot.slane %v88, %v96
    %v98 = vlaneseq
    %v99 = vshrl.u32 %v98, 7
    %v100 = vsub.s32 2, %v99
    %v101 = vrot.slane %v88, %v100
    %v102 = vlaneseq
    %v103 = vshrl.u32 %v102, 7
    %v104 = vsub.s32 3, %v103
    %v105 = vrot.slane %v88, %v104
    %v106 = vlaneseq
    %v107 = vshrl.u32 %v106, 7
    %v108 = vsub.s32 4, %v107
    %v109 = vrot.slane %v88, %v108
    %v175 = vunpack.c.l.b16 %v28
    %v176 = vunpack.c.h.b16 %v28
    %v177 = vunpack.c.l.b16 %v29
    %v178 = vunpack.c.h.b16 %v29
    %v179 = vunpack.c.l.b16 %v30
    %v180 = vunpack.c.l.b16 %v31
    %v181 = vunpack.c.h.b16 %v31
    %v182 = vunpack.c.l.b16 %v32
    %v183 = vunpack.c.h.b16 %v32
    %v184 = vunpack.c.l.b16 %v33
    %v185 = vunpack.c.l.b16 %v34
    %v186 = vunpack.c.h.b16 %v34
    %v187 = vunpack.c.l.b16 %v35
    %v188 = vunpack.c.h.b16 %v35
    %v189 = vunpack.c.l.b16 %v36
    %v190 = vunpack.c.l.b16 %v37
    %v191 = vunpack.c.h.b16 %v37
    %v192 = vunpack.c.l.b16 %v38
    %v193 = vunpack.c.h.b16 %v38
    %v194 = vunpack.c.l.b16 %v39
    %v195 = vunpack.c.l.b16 %v40
    %v196 = vunpack.c.h.b16 %v40
    %v197 = vunpack.c.l.b16 %v41
    %v198 = vunpack.c.h.b16 %v41
    %v199 = vunpack.c.l.b16 %v42
    %v200 = vunpack.c.l.b16 %v43
    %v201 = vunpack.c.h.b16 %v43
    %v202 = vunpack.c.l.b16 %v44
    %v203 = vunpack.c.h.b16 %v44
    %v204 = vunpack.c.l.b16 %v45
    %v205 = vunpack.c.l.b16 %v46
    %v206 = vunpack.c.h.b16 %v46
    %v207 = vunpack.c.l.b16 %v47
    %v208 = vunpack.c.h.b16 %v47
    %v209 = vunpack.c.l.b16 %v48
    %v210 = vunpack.c.l.b16 %v49
    %v211 = vunpack.c.h.b16 %v49
    %v212 = vunpack.c.l.b16 %v50
    %v213 = vunpack.c.h.b16 %v50
    %v214 = vunpack.c.l.b16 %v51
    %v215 = vunpack.c.l.b16 %v52
    %v216 = vunpack.c.h.b16 %v52
    %v217 = vunpack.c.l.b16 %v53
    %v218 = vunpack.c.h.b16 %v53
    %v219 = vunpack.c.l.b16 %v54
    %v220 = vunpack.c.l.b16 %v55
    %v221 = vunpack.c.h.b16 %v55
    %v222 = vunpack.c.l.b16 %v56
    %v223 = vunpack.c.h.b16 %v56
    %v224 = vunpack.c.l.b16 %v57
    %v225 = vunpack.c.l.b16 %v58
    %v226 = vunpack.c.h.b16 %v58
    %v227 = vunpack.c.l.b16 %v59
    %v228 = vunpack.c.h.b16 %v59
    %v229 = vunpack.c.l.b16 %v60
    %v230 = vunpack.c.l.b16 %v61
    %v231 = vunpack.c.h.b16 %v61
    %v232 = vunpack.c.l.b16 %v62
    %v233 = vunpack.c.h.b16 %v62
    %v234 = vunpack.c.l.b16 %v63
    %v235 = vunpack.c.l.b16 %v64
    %v236 = vunpack.c.h.b16 %v64
    %v237 = vunpack.c.l.b16 %v65
    %v238 = vunpack.c.h.b16 %v65
    %v239 = vunpack.c.l.b16 %v66
    %v240 = vunpack.c.l.b16 %v67
    %v241 = vunpack.c.h.b16 %v67
    %v242 = vunpack.c.l.b16 %v68
    %v243 = vunpack.c.h.b16 %v68
    %v244 = vunpack.c.l.b16 %v69
    %v245 = vunpack.c.l.b16 %v70
    %v246 = vunpack.c.h.b16 %v70
    %v247 = vunpack.c.l.b16 %v71
    %v248 = vunpack.c.h.b16 %v71
    %v249 = vunpack.c.l.b16 %v72
    %v250 = vunpack.c.l.b16 %v73
    %v251 = vunpack.c.h.b16 %v73
    %v252 = vunpack.c.l.b16 %v74
    %v253 = vunpack.c.h.b16 %v74
    %v254 = vunpack.c.l.b16 %v75
    %v255 = vunpack.c.l.b16 %v76
    %v256 = vunpack.c.h.b16 %v76
    %v257 = vunpack.c.l.b16 %v77
    %v258 = vunpack.c.h.b16 %v77
    %v259 = vunpack.c.l.b16 %v78
    %v260 = vunpack.c.l.b16 %v79
    %v261 = vunpack.c.h.b16 %v79
    %v262 = vunpack.c.l.b16 %v80
    %v263 = vunpack.c.h.b16 %v80
    %v264 = vunpack.c.l.b16 %v81
    %v265 = vunpack.c.l.b16 %v82
    %v266 = vunpack.c.h.b16 %v82
    %v267 = vunpack.c.l.b16 %v83
    %v268 = vunpack.c.h.b16 %v83
    %v269 = vunpack.c.l.b16 %v84
    %v270 = vunpack.c.l.b16 %v85
    %v271 = vunpack.c.h.b16 %v85
    %v272 = vunpack.c.l.b16 %v86
    %v273 = vunpack.c.h.b16 %v86
    %v274 = vunpack.c.l.b16 %v87
    %v275 = vpack.c.b16 %v180, %v175
    %v276 = vpack.c.b16 %v181, %v176
    %v277 = vpack.c.b16 %v182, %v177
    %v278 = vpack.c.b16 %v183, %v178
    %v279 = vpack.c.b16 %v184, %v179
    %v280 = vpack.c.b16 %v190, %v185
    %v281 = vpack.c.b16 %v191, %v186
    %v282 = vpack.c.b16 %v192, %v187
    %v283 = vpack.c.b16 %v193, %v188
    %v284 = vpack.c.b16 %v194, %v189
    %v285 = vpack.c.b16 %v200, %v195
    %v286 = vpack.c.b16 %v201, %v196
    %v287 = vpack.c.b16 %v202, %v197
    %v288 = vpack.c.b16 %v203, %v198
    %v289 = vpack.c.b16 %v204, %v199
    %v290 = vpack.c.b16 %v210, %v205
    %v291 = vpack.c.b16 %v211, %v206
    %v292 = vpack.c.b16 %v212, %v207
    %v293 = vpack.c.b16 %v213, %v208
    %v294 = vpack.c.b16 %v214, %v209
    %v295 = vpack.c.b16 %v220, %v215
    %v296 = vpack.c.b16 %v221, %v216
    %v297 = vpack.c.b16 %v222, %v217
    %v298 = vpack.c.b16 %v223, %v218
    %v299 = vpack.c.b16 %v224, %v219
    %v300 = vpack.c.b16 %v230, %v225
    %v301 = vpack.c.b16 %v231, %v226
    %v302 = vpack.c.b16 %v232, %v227
    %v303 = vpack.c.b16 %v233, %v228
    %v304 = vpack.c.b16 %v234, %v229
    %v305 = vpack.c.b16 %v240, %v235
    %v306 = vpack.c.b16 %v241, %v236
    %v307 = vpack.c.b16 %v242, %v237
    %v308 = vpack.c.b16 %v243, %v238
    %v309 = vpack.c.b16 %v244, %v239
    %v310 = vpack.c.b16 %v250, %v245
    %v311 = vpack.c.b16 %v251, %v246
    %v312 = vpack.c.b16 %v252, %v247
    %v313 = vpack.c.b16 %v253, %v248
    %v314 = vpack.c.b16 %v254, %v249
    %v315 = vpack.c.b16 %v260, %v255
    %v316 = vpack.c.b16 %v261, %v256
    %v317 = vpack.c.b16 %v262, %v257
    %v318 = vpack.c.b16 %v263, %v258
    %v319 = vpack.c.b16 %v264, %v259
    %v320 = vpack.c.b16 %v270, %v265
    %v321 = vpack.c.b16 %v271, %v266
    %v322 = vpack.c.b16 %v272, %v267
    %v323 = vpack.c.b16 %v273, %v268
    %v324 = vpack.c.b16 %v274, %v269
    %vm370 = vcmask 244736
    %v372 = vsel %vm370, %v27, 0
    %vm374 = vcmask 1046528
    %v376 = vsel %vm374, %v320, 0
    %v379 = vsel %vm374, %v321, 0
    %v382 = vsel %vm374, %v322, 0
    %v385 = vsel %vm374, %v323, 0
    %v388 = vsel %vm374, %v324, 0
    %390 = vmatprep.subr.bf16.mxu0 %v311
    %391 = vmatpush1.bf16.msra.mxu0 %v310
    %392 = vmatprep.subr.bf16.mxu0 %v306
    %393 = vmatpush1.bf16.msra.mxu0 %v305
    %394 = vmatprep.subr.bf16.mxu0 %v301
    %395 = vmatpush1.bf16.msra.mxu0 %v300
    %396 = vmatprep.subr.bf16.mxu0 %v296
    %397 = vmatpush1.bf16.msra.mxu0 %v295
    %398 = vmatprep.subr.bf16.mxu0 %v291
    %399 = vmatpush1.bf16.msra.mxu0 %v290
    %400 = vmatprep.subr.bf16.mxu0 %v286
    %401 = vmatpush1.bf16.msra.mxu0 %v285
    %402 = vmatprep.subr.bf16.mxu0 %v281
    %403 = vmatpush1.bf16.msra.mxu0 %v280
    %404 = vmatprep.subr.bf16.mxu0 %v276
    %405 = vmatpush1.bf16.msra.mxu0 %v275
    %406 = vmatprep.subr.bf16.mxu0 0
    %407 = vmatpush2.bf16.msra.mxu0 0
    %408 = vmatprep.subr.bf16.mxu0 0
    %409 = vmatpush2.bf16.msra.mxu0 0
    %410 = vmatprep.subr.bf16.mxu0 0
    %411 = vmatpush2.bf16.msra.mxu0 0
    %412 = vmatprep.subr.bf16.mxu0 0
    %413 = vmatpush2.bf16.msra.mxu0 0
    %414 = vmatprep.subr.bf16.mxu0 0
    %415 = vmatpush2.bf16.msra.mxu0 0
    %416 = vmatprep.subr.bf16.mxu0 0
    %417 = vmatpush2.bf16.msra.mxu0 0
    %418 = vmatprep.subr.bf16.mxu0 %v379
    %419 = vmatpush2.bf16.msra.mxu0 %v376
    %420 = vmatprep.subr.bf16.mxu0 %v316
    %421 = vmatpush2.bf16.msra.mxu0 %v315
    %422 = vmatprep.mubr.bf16.mxu0 %v372
    %423 = vmatmul.mubr.bf16.gmra.mxu0 %v26
    %v424 = vpop.f32.mrf.mxu0
    %v425 = vadd.f32 %v93, %v424
    %v426 = vpop.f32.mrf.mxu0
    %v427 = vadd.f32 %v97, %v426
    %v428 = vpop.f32.mrf.mxu0
    %v429 = vadd.f32 %v93, %v428
    %v430 = vpop.f32.mrf.mxu0
    %v431 = vadd.f32 %v97, %v430
    %432 = vdwg.mxu0
    %433 = vmatprep.subr.bf16.mxu0 %v313
    %434 = vmatpush1.bf16.msra.mxu0 %v312
    %435 = vmatprep.subr.bf16.mxu0 %v308
    %436 = vmatpush1.bf16.msra.mxu0 %v307
    %437 = vmatprep.subr.bf16.mxu0 %v303
    %438 = vmatpush1.bf16.msra.mxu0 %v302
    %439 = vmatprep.subr.bf16.mxu0 %v298
    %440 = vmatpush1.bf16.msra.mxu0 %v297
    %441 = vmatprep.subr.bf16.mxu0 %v293
    %442 = vmatpush1.bf16.msra.mxu0 %v292
    %443 = vmatprep.subr.bf16.mxu0 %v288
    %444 = vmatpush1.bf16.msra.mxu0 %v287
    %445 = vmatprep.subr.bf16.mxu0 %v283
    %446 = vmatpush1.bf16.msra.mxu0 %v282
    %447 = vmatprep.subr.bf16.mxu0 %v278
    %448 = vmatpush1.bf16.msra.mxu0 %v277
    %449 = vmatprep.subr.bf16.mxu0 0
    %450 = vmatpush2.bf16.msra.mxu0 0
    %451 = vmatprep.subr.bf16.mxu0 0
    %452 = vmatpush2.bf16.msra.mxu0 0
    %453 = vmatprep.subr.bf16.mxu0 0
    %454 = vmatpush2.bf16.msra.mxu0 0
    %455 = vmatprep.subr.bf16.mxu0 0
    %456 = vmatpush2.bf16.msra.mxu0 0
    %457 = vmatprep.subr.bf16.mxu0 0
    %458 = vmatpush2.bf16.msra.mxu0 0
    %459 = vmatprep.subr.bf16.mxu0 0
    %460 = vmatpush2.bf16.msra.mxu0 0
    %461 = vmatprep.subr.bf16.mxu0 %v385
    %462 = vmatpush2.bf16.msra.mxu0 %v382
    %463 = vmatprep.subr.bf16.mxu0 %v318
    %464 = vmatpush2.bf16.msra.mxu0 %v317
    %465 = vmatprep.mubr.bf16.mxu0 %v372
    %466 = vmatmul.mubr.bf16.gmra.mxu0 %v26
    %v467 = vpop.f32.mrf.mxu0
    %v468 = vadd.f32 %v101, %v467
    %v469 = vpop.f32.mrf.mxu0
    %v470 = vadd.f32 %v105, %v469
    %v471 = vpop.f32.mrf.mxu0
    %v472 = vadd.f32 %v101, %v471
    %v473 = vpop.f32.mrf.mxu0
    %v474 = vadd.f32 %v105, %v473
    %475 = vdwg.mxu0
    %476 = vmatprep.subr.bf16.mxu0 0
    %477 = vmatpush1.bf16.msra.mxu0 %v314
    %478 = vmatprep.subr.bf16.mxu0 0
    %479 = vmatpush1.bf16.msra.mxu0 %v309
    %480 = vmatprep.subr.bf16.mxu0 0
    %481 = vmatpush1.bf16.msra.mxu0 %v304
    %482 = vmatprep.subr.bf16.mxu0 0
    %483 = vmatpush1.bf16.msra.mxu0 %v299
    %484 = vmatprep.subr.bf16.mxu0 0
    %485 = vmatpush1.bf16.msra.mxu0 %v294
    %486 = vmatprep.subr.bf16.mxu0 0
    %487 = vmatpush1.bf16.msra.mxu0 %v289
    %488 = vmatprep.subr.bf16.mxu0 0
    %489 = vmatpush1.bf16.msra.mxu0 %v284
    %490 = vmatprep.subr.bf16.mxu0 0
    %491 = vmatpush1.bf16.msra.mxu0 %v279
    %492 = vmatprep.subr.bf16.mxu0 0
    %493 = vmatpush2.bf16.msra.mxu0 0
    %494 = vmatprep.subr.bf16.mxu0 0
    %495 = vmatpush2.bf16.msra.mxu0 0
    %496 = vmatprep.subr.bf16.mxu0 0
    %497 = vmatpush2.bf16.msra.mxu0 0
    %498 = vmatprep.subr.bf16.mxu0 0
    %499 = vmatpush2.bf16.msra.mxu0 0
    %500 = vmatprep.subr.bf16.mxu0 0
    %501 = vmatpush2.bf16.msra.mxu0 0
    %502 = vmatprep.subr.bf16.mxu0 0
    %503 = vmatpush2.bf16.msra.mxu0 0
    %504 = vmatprep.subr.bf16.mxu0 0
    %505 = vmatpush2.bf16.msra.mxu0 %v388
    %506 = vmatprep.subr.bf16.mxu0 0
    %507 = vmatpush2.bf16.msra.mxu0 %v319
    %508 = vmatprep.mubr.bf16.mxu0 %v372
    %509 = vmatmul.mubr.bf16.gmra.mxu0 %v26
    %v510 = vpop.f32.mrf.mxu0
    %v511 = vadd.f32 %v109, %v510
    %v512 = vpop.f32.mrf.mxu0
    %v513 = vpop.f32.mrf.mxu0
    %v514 = vadd.f32 %v109, %v513
    %v515 = vpop.f32.mrf.mxu0
    %516 = vdwg.mxu0
    %v517 = vmax.f32 %v425, 0.0
    %v518 = vmax.f32 %v427, 0.0
    %v519 = vmax.f32 %v468, 0.0
    %v520 = vmax.f32 %v470, 0.0
    %v521 = vmax.f32 %v511, 0.0
    %v522 = vmax.f32 %v429, 0.0
    %v523 = vmax.f32 %v431, 0.0
    %v524 = vmax.f32 %v472, 0.0
    %v525 = vmax.f32 %v474, 0.0
    %v526 = vmax.f32 %v514, 0.0
    %v527 = vpack.c.bf16 %v522, %v517
    %v528 = vpack.c.bf16 %v523, %v518
    %v529 = vpack.c.bf16 %v524, %v519
    %v530 = vpack.c.bf16 %v525, %v520
    %v531 = vpack.c.bf16 %v526, %v521
    %v532 = vld [vmem:[%s3] sm:$0xff]
    %v533 = vld [vmem:[%s3 + $0x8] sm:$0xff]
    %v534 = vld [vmem:[%s3 + $0x10] sm:$0xff]
    %v535 = vld [vmem:[%s3 + $0x18] sm:$0xff]
    %v536 = vld [vmem:[%s3 + $0x20] sm:$0xff]
    %v537 = vld [vmem:[%s3 + $0x28] sm:$0xff]
    %v538 = vld [vmem:[%s3 + $0x30] sm:$0xff]
    %v539 = vld [vmem:[%s3 + $0x38] sm:$0xff]
    %v540 = vld [vmem:[%s3 + $0x40] sm:$0xff]
    %v541 = vld [vmem:[%s3 + $0x48] sm:$0xff]
    %v542 = vld [vmem:[%s3 + $0x50] sm:$0xff]
    %v543 = vld [vmem:[%s3 + $0x58] sm:$0xff]
    %v544 = vld [vmem:[%s3 + $0x60] sm:$0xff]
    %v545 = vld [vmem:[%s3 + $0x68] sm:$0xff]
    %v546 = vld [vmem:[%s3 + $0x70] sm:$0xff]
    %v547 = vld [vmem:[%s3 + $0x78] sm:$0xff]
    %v548 = vld [vmem:[%s3 + $0x80] sm:$0xff]
    %v549 = vld [vmem:[%s3 + $0x88] sm:$0xff]
    %v550 = vld [vmem:[%s3 + $0x90] sm:$0xff]
    %v551 = vld [vmem:[%s3 + $0x98] sm:$0xff]
    %v552 = vld [vmem:[%s3 + $0xa0] sm:$0xff]
    %v553 = vld [vmem:[%s3 + $0xa8] sm:$0xff]
    %v554 = vld [vmem:[%s3 + $0xb0] sm:$0xff]
    %v555 = vld [vmem:[%s3 + $0xb8] sm:$0xff]
    %v556 = vld [vmem:[%s3 + $0xc0] sm:$0xff]
    %v557 = vld [vmem:[%s3 + $0xc8] sm:$0xff]
    %v558 = vld [vmem:[%s3 + $0xd0] sm:$0xff]
    %v559 = vld [vmem:[%s3 + $0xd8] sm:$0xff]
    %v560 = vld [vmem:[%s3 + $0xe0] sm:$0xff]
    %v561 = vld [vmem:[%s3 + $0xe8] sm:$0xff]
    %v562 = vld [vmem:[%s3 + $0xf0] sm:$0xff]
    %v563 = vld [vmem:[%s3 + $0xf8] sm:$0xff]
    %v564 = vld [vmem:[%s3 + $0x100] sm:$0xff]
    %v565 = vld [vmem:[%s3 + $0x108] sm:$0xff]
    %v566 = vld [vmem:[%s3 + $0x110] sm:$0xff]
    %v567 = vld [vmem:[%s3 + $0x118] sm:$0xff]
    %v568 = vld [vmem:[%s3 + $0x120] sm:$0xff]
    %v569 = vld [vmem:[%s3 + $0x128] sm:$0xff]
    %v570 = vld [vmem:[%s3 + $0x130] sm:$0xff]
    %v571 = vld [vmem:[%s3 + $0x138] sm:$0xff]
    %v572 = vld [vmem:[%s3 + $0x140] sm:$0xff]
    %v573 = vld [vmem:[%s3 + $0x148] sm:$0xff]
    %v574 = vld [vmem:[%s3 + $0x150] sm:$0xff]
    %v575 = vld [vmem:[%s3 + $0x158] sm:$0xff]
    %v576 = vld [vmem:[%s3 + $0x160] sm:$0xff]
    %v577 = vld [vmem:[%s3 + $0x168] sm:$0xff]
    %v578 = vld [vmem:[%s3 + $0x170] sm:$0xff]
    %v579 = vld [vmem:[%s3 + $0x178] sm:$0xff]
    %v580 = vld [vmem:[%s3 + $0x180] sm:$0xff]
    %v581 = vld [vmem:[%s3 + $0x188] sm:$0xff]
    %v582 = vld [vmem:[%s3 + $0x190] sm:$0xff]
    %v583 = vld [vmem:[%s3 + $0x198] sm:$0xff]
    %v584 = vld [vmem:[%s3 + $0x1a0] sm:$0xff]
    %v585 = vld [vmem:[%s3 + $0x1a8] sm:$0xff]
    %v586 = vld [vmem:[%s3 + $0x1b0] sm:$0xff]
    %v587 = vld [vmem:[%s3 + $0x1b8] sm:$0xff]
    %v588 = vld [vmem:[%s3 + $0x1c0] sm:$0xff]
    %v589 = vld [vmem:[%s3 + $0x1c8] sm:$0xff]
    %v590 = vld [vmem:[%s3 + $0x1d0] sm:$0xff]
    %v591 = vld [vmem:[%s3 + $0x1d8] sm:$0xff]
    %v592 = vld [vmem:[%s3 + $0x1e0] sm:$0xff]
    %v593 = vld [vmem:[%s3 + $0x1e8] sm:$0xff]
    %v594 = vld [vmem:[%s3 + $0x1f0] sm:$0xff]
    %v595 = vld [vmem:[%s3 + $0x1f8] sm:$0xff]
    %v596 = vld [vmem:[%s3 + $0x200] sm:$0xff]
    %v597 = vld [vmem:[%s3 + $0x208] sm:$0xff]
    %v598 = vld [vmem:[%s3 + $0x210] sm:$0xff]
    %v599 = vld [vmem:[%s3 + $0x218] sm:$0xff]
    %v600 = vld [vmem:[%s3 + $0x220] sm:$0xff]
    %v601 = vld [vmem:[%s3 + $0x228] sm:$0xff]
    %v602 = vld [vmem:[%s3 + $0x230] sm:$0xff]
    %v603 = vld [vmem:[%s3 + $0x238] sm:$0xff]
    %v604 = vld [vmem:[%s3 + $0x240] sm:$0xff]
    %v605 = vld [vmem:[%s3 + $0x248] sm:$0xff]
    %v606 = vld [vmem:[%s3 + $0x250] sm:$0xff]
    %v607 = vld [vmem:[%s3 + $0x258] sm:$0xff]
    %v608 = vld [vmem:[%s3 + $0x260] sm:$0xff]
    %v609 = vld [vmem:[%s3 + $0x268] sm:$0xff]
    %v610 = vld [vmem:[%s3 + $0x270] sm:$0xff]
    %v611 = vld [vmem:[%s3 + $0x278] sm:$0xff]
    %v612 = vld [vmem:[%s4] sm:$0x3]
    %v614 = vlaneseq
    %v615 = vshrl.u32 %v614, 7
    %v616 = vsub.s32 0, %v615
    %v617 = vrot.slane %v612, %v616
    %v618 = vlaneseq
    %v619 = vshrl.u32 %v618, 7
    %v620 = vsub.s32 1, %v619
    %v621 = vrot.slane %v612, %v620
    %v704 = vunpack.c.l.b16 %v532
    %v705 = vunpack.c.h.b16 %v532
    %v706 = vunpack.c.l.b16 %v533
    %v707 = vunpack.c.h.b16 %v533
    %v708 = vunpack.c.l.b16 %v534
    %v709 = vunpack.c.h.b16 %v534
    %v710 = vunpack.c.l.b16 %v535
    %v711 = vunpack.c.h.b16 %v535
    %v712 = vunpack.c.l.b16 %v536
    %v713 = vunpack.c.h.b16 %v536
    %v714 = vunpack.c.l.b16 %v537
    %v715 = vunpack.c.h.b16 %v537
    %v716 = vunpack.c.l.b16 %v538
    %v717 = vunpack.c.h.b16 %v538
    %v718 = vunpack.c.l.b16 %v539
    %v719 = vunpack.c.h.b16 %v539
    %v720 = vunpack.c.l.b16 %v540
    %v721 = vunpack.c.h.b16 %v540
    %v722 = vunpack.c.l.b16 %v541
    %v723 = vunpack.c.h.b16 %v541
    %v724 = vunpack.c.l.b16 %v542
    %v725 = vunpack.c.h.b16 %v542
    %v726 = vunpack.c.l.b16 %v543
    %v727 = vunpack.c.h.b16 %v543
    %v728 = vunpack.c.l.b16 %v544
    %v729 = vunpack.c.h.b16 %v544
    %v730 = vunpack.c.l.b16 %v545
    %v731 = vunpack.c.h.b16 %v545
    %v732 = vunpack.c.l.b16 %v546
    %v733 = vunpack.c.h.b16 %v546
    %v734 = vunpack.c.l.b16 %v547
    %v735 = vunpack.c.h.b16 %v547
    %v736 = vunpack.c.l.b16 %v548
    %v737 = vunpack.c.h.b16 %v548
    %v738 = vunpack.c.l.b16 %v549
    %v739 = vunpack.c.h.b16 %v549
    %v740 = vunpack.c.l.b16 %v550
    %v741 = vunpack.c.h.b16 %v550
    %v742 = vunpack.c.l.b16 %v551
    %v743 = vunpack.c.h.b16 %v551
    %v744 = vunpack.c.l.b16 %v552
    %v745 = vunpack.c.h.b16 %v552
    %v746 = vunpack.c.l.b16 %v553
    %v747 = vunpack.c.h.b16 %v553
    %v748 = vunpack.c.l.b16 %v554
    %v749 = vunpack.c.h.b16 %v554
    %v750 = vunpack.c.l.b16 %v555
    %v751 = vunpack.c.h.b16 %v555
    %v752 = vunpack.c.l.b16 %v556
    %v753 = vunpack.c.h.b16 %v556
    %v754 = vunpack.c.l.b16 %v557
    %v755 = vunpack.c.h.b16 %v557
    %v756 = vunpack.c.l.b16 %v558
    %v757 = vunpack.c.h.b16 %v558
    %v758 = vunpack.c.l.b16 %v559
    %v759 = vunpack.c.h.b16 %v559
    %v760 = vunpack.c.l.b16 %v560
    %v761 = vunpack.c.h.b16 %v560
    %v762 = vunpack.c.l.b16 %v561
    %v763 = vunpack.c.h.b16 %v561
    %v764 = vunpack.c.l.b16 %v562
    %v765 = vunpack.c.h.b16 %v562
    %v766 = vunpack.c.l.b16 %v563
    %v767 = vunpack.c.h.b16 %v563
    %v768 = vunpack.c.l.b16 %v564
    %v769 = vunpack.c.h.b16 %v564
    %v770 = vunpack.c.l.b16 %v565
    %v771 = vunpack.c.h.b16 %v565
    %v772 = vunpack.c.l.b16 %v566
    %v773 = vunpack.c.h.b16 %v566
    %v774 = vunpack.c.l.b16 %v567
    %v775 = vunpack.c.h.b16 %v567
    %v776 = vunpack.c.l.b16 %v568
    %v777 = vunpack.c.h.b16 %v568
    %v778 = vunpack.c.l.b16 %v569
    %v779 = vunpack.c.h.b16 %v569
    %v780 = vunpack.c.l.b16 %v570
    %v781 = vunpack.c.h.b16 %v570
    %v782 = vunpack.c.l.b16 %v571
    %v783 = vunpack.c.h.b16 %v571
    %v784 = vunpack.c.l.b16 %v572
    %v785 = vunpack.c.h.b16 %v572
    %v786 = vunpack.c.l.b16 %v573
    %v787 = vunpack.c.h.b16 %v573
    %v788 = vunpack.c.l.b16 %v574
    %v789 = vunpack.c.h.b16 %v574
    %v790 = vunpack.c.l.b16 %v575
    %v791 = vunpack.c.h.b16 %v575
    %v792 = vunpack.c.l.b16 %v576
    %v793 = vunpack.c.h.b16 %v576
    %v794 = vunpack.c.l.b16 %v577
    %v795 = vunpack.c.h.b16 %v577
    %v796 = vunpack.c.l.b16 %v578
    %v797 = vunpack.c.h.b16 %v578
    %v798 = vunpack.c.l.b16 %v579
    %v799 = vunpack.c.h.b16 %v579
    %v800 = vunpack.c.l.b16 %v580
    %v801 = vunpack.c.h.b16 %v580
    %v802 = vunpack.c.l.b16 %v581
    %v803 = vunpack.c.h.b16 %v581
    %v804 = vunpack.c.l.b16 %v582
    %v805 = vunpack.c.h.b16 %v582
    %v806 = vunpack.c.l.b16 %v583
    %v807 = vunpack.c.h.b16 %v583
    %v808 = vunpack.c.l.b16 %v584
    %v809 = vunpack.c.h.b16 %v584
    %v810 = vunpack.c.l.b16 %v585
    %v811 = vunpack.c.h.b16 %v585
    %v812 = vunpack.c.l.b16 %v586
    %v813 = vunpack.c.h.b16 %v586
    %v814 = vunpack.c.l.b16 %v587
    %v815 = vunpack.c.h.b16 %v587
    %v816 = vunpack.c.l.b16 %v588
    %v817 = vunpack.c.h.b16 %v588
    %v818 = vunpack.c.l.b16 %v589
    %v819 = vunpack.c.h.b16 %v589
    %v820 = vunpack.c.l.b16 %v590
    %v821 = vunpack.c.h.b16 %v590
    %v822 = vunpack.c.l.b16 %v591
    %v823 = vunpack.c.h.b16 %v591
    %v824 = vunpack.c.l.b16 %v592
    %v825 = vunpack.c.h.b16 %v592
    %v826 = vunpack.c.l.b16 %v593
    %v827 = vunpack.c.h.b16 %v593
    %v828 = vunpack.c.l.b16 %v594
    %v829 = vunpack.c.h.b16 %v594
    %v830 = vunpack.c.l.b16 %v595
    %v831 = vunpack.c.h.b16 %v595
    %v832 = vunpack.c.l.b16 %v596
    %v833 = vunpack.c.h.b16 %v596
    %v834 = vunpack.c.l.b16 %v597
    %v835 = vunpack.c.h.b16 %v597
    %v836 = vunpack.c.l.b16 %v598
    %v837 = vunpack.c.h.b16 %v598
    %v838 = vunpack.c.l.b16 %v599
    %v839 = vunpack.c.h.b16 %v599
    %v840 = vunpack.c.l.b16 %v600
    %v841 = vunpack.c.h.b16 %v600
    %v842 = vunpack.c.l.b16 %v601
    %v843 = vunpack.c.h.b16 %v601
    %v844 = vunpack.c.l.b16 %v602
    %v845 = vunpack.c.h.b16 %v602
    %v846 = vunpack.c.l.b16 %v603
    %v847 = vunpack.c.h.b16 %v603
    %v848 = vunpack.c.l.b16 %v604
    %v849 = vunpack.c.h.b16 %v604
    %v850 = vunpack.c.l.b16 %v605
    %v851 = vunpack.c.h.b16 %v605
    %v852 = vunpack.c.l.b16 %v606
    %v853 = vunpack.c.h.b16 %v606
    %v854 = vunpack.c.l.b16 %v607
    %v855 = vunpack.c.h.b16 %v607
    %v856 = vunpack.c.l.b16 %v608
    %v857 = vunpack.c.h.b16 %v608
    %v858 = vunpack.c.l.b16 %v609
    %v859 = vunpack.c.h.b16 %v609
    %v860 = vunpack.c.l.b16 %v610
    %v861 = vunpack.c.h.b16 %v610
    %v862 = vunpack.c.l.b16 %v611
    %v863 = vunpack.c.h.b16 %v611
    %v864 = vpack.c.b16 %v706, %v704
    %v865 = vpack.c.b16 %v707, %v705
    %v866 = vpack.c.b16 %v710, %v708
    %v867 = vpack.c.b16 %v711, %v709
    %v868 = vpack.c.b16 %v714, %v712
    %v869 = vpack.c.b16 %v715, %v713
    %v870 = vpack.c.b16 %v718, %v716
    %v871 = vpack.c.b16 %v719, %v717
    %v872 = vpack.c.b16 %v722, %v720
    %v873 = vpack.c.b16 %v723, %v721
    %v874 = vpack.c.b16 %v726, %v724
    %v875 = vpack.c.b16 %v727, %v725
    %v876 = vpack.c.b16 %v730, %v728
    %v877 = vpack.c.b16 %v731, %v729
    %v878 = vpack.c.b16 %v734, %v732
    %v879 = vpack.c.b16 %v735, %v733
    %v880 = vpack.c.b16 %v738, %v736
    %v881 = vpack.c.b16 %v739, %v737
    %v882 = vpack.c.b16 %v742, %v740
    %v883 = vpack.c.b16 %v743, %v741
    %v884 = vpack.c.b16 %v746, %v744
    %v885 = vpack.c.b16 %v747, %v745
    %v886 = vpack.c.b16 %v750, %v748
    %v887 = vpack.c.b16 %v751, %v749
    %v888 = vpack.c.b16 %v754, %v752
    %v889 = vpack.c.b16 %v755, %v753
    %v890 = vpack.c.b16 %v758, %v756
    %v891 = vpack.c.b16 %v759, %v757
    %v892 = vpack.c.b16 %v762, %v760
    %v893 = vpack.c.b16 %v763, %v761
    %v894 = vpack.c.b16 %v766, %v764
    %v895 = vpack.c.b16 %v767, %v765
    %v896 = vpack.c.b16 %v770, %v768
    %v897 = vpack.c.b16 %v771, %v769
    %v898 = vpack.c.b16 %v774, %v772
    %v899 = vpack.c.b16 %v775, %v773
    %v900 = vpack.c.b16 %v778, %v776
    %v901 = vpack.c.b16 %v779, %v777
    %v902 = vpack.c.b16 %v782, %v780
    %v903 = vpack.c.b16 %v783, %v781
    %v904 = vpack.c.b16 %v786, %v784
    %v905 = vpack.c.b16 %v787, %v785
    %v906 = vpack.c.b16 %v790, %v788
    %v907 = vpack.c.b16 %v791, %v789
    %v908 = vpack.c.b16 %v794, %v792
    %v909 = vpack.c.b16 %v795, %v793
    %v910 = vpack.c.b16 %v798, %v796
    %v911 = vpack.c.b16 %v799, %v797
    %v912 = vpack.c.b16 %v802, %v800
    %v913 = vpack.c.b16 %v803, %v801
    %v914 = vpack.c.b16 %v806, %v804
    %v915 = vpack.c.b16 %v807, %v805
    %v916 = vpack.c.b16 %v810, %v808
    %v917 = vpack.c.b16 %v811, %v809
    %v918 = vpack.c.b16 %v814, %v812
    %v919 = vpack.c.b16 %v815, %v813
    %v920 = vpack.c.b16 %v818, %v816
    %v921 = vpack.c.b16 %v819, %v817
    %v922 = vpack.c.b16 %v822, %v820
    %v923 = vpack.c.b16 %v823, %v821
    %v924 = vpack.c.b16 %v826, %v824
    %v925 = vpack.c.b16 %v827, %v825
    %v926 = vpack.c.b16 %v830, %v828
    %v927 = vpack.c.b16 %v831, %v829
    %v928 = vpack.c.b16 %v834, %v832
    %v929 = vpack.c.b16 %v835, %v833
    %v930 = vpack.c.b16 %v838, %v836
    %v931 = vpack.c.b16 %v839, %v837
    %v932 = vpack.c.b16 %v842, %v840
    %v933 = vpack.c.b16 %v843, %v841
    %v934 = vpack.c.b16 %v846, %v844
    %v935 = vpack.c.b16 %v847, %v845
    %v936 = vpack.c.b16 %v850, %v848
    %v937 = vpack.c.b16 %v851, %v849
    %v938 = vpack.c.b16 %v854, %v852
    %v939 = vpack.c.b16 %v855, %v853
    %v940 = vpack.c.b16 %v858, %v856
    %v941 = vpack.c.b16 %v859, %v857
    %v942 = vpack.c.b16 %v862, %v860
    %v943 = vpack.c.b16 %v863, %v861
    %1024 = vmatprep.subr.bf16.mxu0 %v879
    %1025 = vmatpush1.bf16.msra.mxu0 %v878
    %1026 = vmatprep.subr.bf16.mxu0 %v877
    %1027 = vmatpush1.bf16.msra.mxu0 %v876
    %1028 = vmatprep.subr.bf16.mxu0 %v875
    %1029 = vmatpush1.bf16.msra.mxu0 %v874
    %1030 = vmatprep.subr.bf16.mxu0 %v873
    %1031 = vmatpush1.bf16.msra.mxu0 %v872
    %1032 = vmatprep.subr.bf16.mxu0 %v871
    %1033 = vmatpush1.bf16.msra.mxu0 %v870
    %1034 = vmatprep.subr.bf16.mxu0 %v869
    %1035 = vmatpush1.bf16.msra.mxu0 %v868
    %1036 = vmatprep.subr.bf16.mxu0 %v867
    %1037 = vmatpush1.bf16.msra.mxu0 %v866
    %1038 = vmatprep.subr.bf16.mxu0 %v865
    %1039 = vmatpush1.bf16.msra.mxu0 %v864
    %1040 = vmatprep.subr.bf16.mxu0 %v895
    %1041 = vmatpush2.bf16.msra.mxu0 %v894
    %1042 = vmatprep.subr.bf16.mxu0 %v893
    %1043 = vmatpush2.bf16.msra.mxu0 %v892
    %1044 = vmatprep.subr.bf16.mxu0 %v891
    %1045 = vmatpush2.bf16.msra.mxu0 %v890
    %1046 = vmatprep.subr.bf16.mxu0 %v889
    %1047 = vmatpush2.bf16.msra.mxu0 %v888
    %1048 = vmatprep.subr.bf16.mxu0 %v887
    %1049 = vmatpush2.bf16.msra.mxu0 %v886
    %1050 = vmatprep.subr.bf16.mxu0 %v885
    %1051 = vmatpush2.bf16.msra.mxu0 %v884
    %1052 = vmatprep.subr.bf16.mxu0 %v883
    %1053 = vmatpush2.bf16.msra.mxu0 %v882
    %1054 = vmatprep.subr.bf16.mxu0 %v881
    %1055 = vmatpush2.bf16.msra.mxu0 %v880
    %1056 = vmatprep.mubr.bf16.mxu0 %v528
    %1057 = vmatmul.mubr.bf16.gmra.mxu0 %v527
    %v1058 = vpop.f32.mrf.mxu0
    %v1059 = vadd.f32 %v617, %v1058
    %v1060 = vpop.f32.mrf.mxu0
    %v1061 = vadd.f32 %v621, %v1060
    %v1062 = vpop.f32.mrf.mxu0
    %v1063 = vadd.f32 %v617, %v1062
    %v1064 = vpop.f32.mrf.mxu0
    %v1065 = vadd.f32 %v621, %v1064
    %1066 = vdwg.mxu0
    %1067 = vmatprep.subr.bf16.mxu0 %v911
    %1068 = vmatpush1.bf16.msra.mxu0 %v910
    %1069 = vmatprep.subr.bf16.mxu0 %v909
    %1070 = vmatpush1.bf16.msra.mxu0 %v908
    %1071 = vmatprep.subr.bf16.mxu0 %v907
    %1072 = vmatpush1.bf16.msra.mxu0 %v906
    %1073 = vmatprep.subr.bf16.mxu0 %v905
    %1074 = vmatpush1.bf16.msra.mxu0 %v904
    %1075 = vmatprep.subr.bf16.mxu0 %v903
    %1076 = vmatpush1.bf16.msra.mxu0 %v902
    %1077 = vmatprep.subr.bf16.mxu0 %v901
    %1078 = vmatpush1.bf16.msra.mxu0 %v900
    %1079 = vmatprep.subr.bf16.mxu0 %v899
    %1080 = vmatpush1.bf16.msra.mxu0 %v898
    %1081 = vmatprep.subr.bf16.mxu0 %v897
    %1082 = vmatpush1.bf16.msra.mxu0 %v896
    %1083 = vmatprep.subr.bf16.mxu0 %v927
    %1084 = vmatpush2.bf16.msra.mxu0 %v926
    %1085 = vmatprep.subr.bf16.mxu0 %v925
    %1086 = vmatpush2.bf16.msra.mxu0 %v924
    %1087 = vmatprep.subr.bf16.mxu0 %v923
    %1088 = vmatpush2.bf16.msra.mxu0 %v922
    %1089 = vmatprep.subr.bf16.mxu0 %v921
    %1090 = vmatpush2.bf16.msra.mxu0 %v920
    %1091 = vmatprep.subr.bf16.mxu0 %v919
    %1092 = vmatpush2.bf16.msra.mxu0 %v918
    %1093 = vmatprep.subr.bf16.mxu0 %v917
    %1094 = vmatpush2.bf16.msra.mxu0 %v916
    %1095 = vmatprep.subr.bf16.mxu0 %v915
    %1096 = vmatpush2.bf16.msra.mxu0 %v914
    %1097 = vmatprep.subr.bf16.mxu0 %v913
    %1098 = vmatpush2.bf16.msra.mxu0 %v912
    %1099 = vmatprep.mubr.bf16.mxu0 %v530
    %1100 = vmatmul.mubr.bf16.gmra.mxu0 %v529
    %v1101 = vpop.f32.mrf.mxu0
    %v1102 = vadd.f32 %v1059, %v1101
    %v1103 = vpop.f32.mrf.mxu0
    %v1104 = vadd.f32 %v1061, %v1103
    %v1105 = vpop.f32.mrf.mxu0
    %v1106 = vadd.f32 %v1063, %v1105
    %v1107 = vpop.f32.mrf.mxu0
    %v1108 = vadd.f32 %v1065, %v1107
    %1109 = vdwg.mxu0
    %1110 = vmatprep.subr.bf16.mxu0 %v943
    %1111 = vmatpush1.bf16.msra.mxu0 %v942
    %1112 = vmatprep.subr.bf16.mxu0 %v941
    %1113 = vmatpush1.bf16.msra.mxu0 %v940
    %1114 = vmatprep.subr.bf16.mxu0 %v939
    %1115 = vmatpush1.bf16.msra.mxu0 %v938
    %1116 = vmatprep.subr.bf16.mxu0 %v937
    %1117 = vmatpush1.bf16.msra.mxu0 %v936
    %1118 = vmatprep.subr.bf16.mxu0 %v935
    %1119 = vmatpush1.bf16.msra.mxu0 %v934
    %1120 = vmatprep.subr.bf16.mxu0 %v933
    %1121 = vmatpush1.bf16.msra.mxu0 %v932
    %1122 = vmatprep.subr.bf16.mxu0 %v931
    %1123 = vmatpush1.bf16.msra.mxu0 %v930
    %1124 = vmatprep.subr.bf16.mxu0 %v929
    %1125 = vmatpush1.bf16.msra.mxu0 %v928
    %1126 = vmatprep.subr.bf16.mxu0 0
    %1127 = vmatpush2.bf16.msra.mxu0 0
    %1128 = vmatprep.subr.bf16.mxu0 0
    %1129 = vmatpush2.bf16.msra.mxu0 0
    %1130 = vmatprep.subr.bf16.mxu0 0
    %1131 = vmatpush2.bf16.msra.mxu0 0
    %1132 = vmatprep.subr.bf16.mxu0 0
    %1133 = vmatpush2.bf16.msra.mxu0 0
    %1134 = vmatprep.subr.bf16.mxu0 0
    %1135 = vmatpush2.bf16.msra.mxu0 0
    %1136 = vmatprep.subr.bf16.mxu0 0
    %1137 = vmatpush2.bf16.msra.mxu0 0
    %1138 = vmatprep.subr.bf16.mxu0 0
    %1139 = vmatpush2.bf16.msra.mxu0 0
    %1140 = vmatprep.subr.bf16.mxu0 0
    %1141 = vmatpush2.bf16.msra.mxu0 0
    %1142 = vmatprep.mubr.bf16.mxu0 0
    %1143 = vmatmul.mubr.bf16.gmra.mxu0 %v531
    %v1144 = vpop.f32.mrf.mxu0
    %v1145 = vadd.f32 %v1102, %v1144
    %v1146 = vpop.f32.mrf.mxu0
    %v1147 = vadd.f32 %v1104, %v1146
    %v1148 = vpop.f32.mrf.mxu0
    %v1149 = vadd.f32 %v1106, %v1148
    %v1150 = vpop.f32.mrf.mxu0
    %v1151 = vadd.f32 %v1108, %v1150
    %1152 = vdwg.mxu0
    %1153 = vst [vmem:[#allocation2] sm:$0xff] %v1145
    %1154 = vst.msk [vmem:[#allocation2 + $0x8] sm:$0xff] %vm370, %v1147
    %1155 = vst [vmem:[#allocation2 + $0x10] sm:$0xff] %v1149
    %1156 = vst.msk [vmem:[#allocation2 + $0x18] sm:$0xff] %vm370, %v1151
    // Predicated region
    $region22: #{ffn_forward.1} parent=1 // pred_check
      _
    $region23: #{ffn_forward.1} parent=1 // pred_check_branch
      %1158 = sbr.rel (0) target = $region25
    $region24: #{ffn_forward.1} parent=1 // pred_region
      %s1160 = ssub.s32 512, 512
      %1161 = vsyncadd [#allocation3], %s1160
      %s1162 = sshll.u32 [#allocation2], 4
      %s1163 = int_to_ptr.vmem [resolvable:$true] %s1162
      %1168 = dma.vmem_to_hbm [thread:$0]  %s1163, 512, %s5, [#allocation3], 256, 256, 16
    $region25: #{ffn_forward.1} parent=1 // pred_fallthru
      _
    // Predicated region
    $region26: #{ffn_forward.1} parent=1 // pred_check
      _
    $region27: #{ffn_forward.1} parent=1 // pred_check_branch
      %1170 = sbr.rel (0) target = $region29
    $region28: #{ffn_forward.1} parent=1 // pred_region
      %1171 = dma.done [#allocation3], 512
    $region29: #{ffn_forward.1} parent=1 // pred_fallthru
      _
    %1172 = vsyncpa [#allocation3], 1

</llo_original>
